<compile_context>
chip_gen: v6e
topology: v6e:2x2x1
jax: 0.10.0
libtpu: 0.0.40
codegen_flags: <defaults>
</compile_context>

<pallas_src>
import functools

import jax
import jax.numpy as jnp
from jax.experimental import pallas as pl
from jax.experimental.pallas import tpu as pltpu

LANE = 128      # lane width of a vreg
SUBLANE = 8     # sublane depth of a vreg (f32)


def _round_up(a, b):
    return ((a + b - 1) // b) * b


def _sinsin_kernel(u0_ref, u1_ref, o_ref):
    # u0_ref, u1_ref, o_ref: (tile_r, 128) lane-dense blocks.
    pi = jnp.float32(jnp.pi)
    a = jnp.sin(u0_ref[...].astype(jnp.float32) * pi)   # EUP
    b = jnp.sin(u1_ref[...].astype(jnp.float32) * pi)   # EUP
    o_ref[...] = (a * b).astype(o_ref.dtype)            # VPU + unmasked vst


@functools.partial(jax.jit, static_argnames=("block_rows",))
def _my_feature_pallas(x, *, block_rows=2048):
    """sin(pi*u_0)*sin(pi*u_1) for an (N, 2) array of points -> (N, 1)."""
    n, f = x.shape
    assert f == 2, "expected two input labels: ['u_0', 'u_1']"
    out_dtype = x.dtype

    # De-interleave the two labels (lane-dense layout is built from these).
    u0 = x[:, 0]
    u1 = x[:, 1]

    # Lane-dense layout: N -> (R, 128) with R a multiple of the sublane depth.
    r = _round_up(pl.cdiv(n, LANE), SUBLANE)

    # Fix the number of blocks first, then derive an (8-aligned) tile height.
    # This bounds total padding to < nblocks * SUBLANE rows while keeping all
    # blocks identical (no masked trailing block).
    max_tile = _round_up(block_rows, SUBLANE)
    nblocks = pl.cdiv(r, max_tile)
    tile_r = _round_up(pl.cdiv(r, nblocks), SUBLANE)
    r_pad = nblocks * tile_r
    n_pad = r_pad * LANE

    if n_pad != n:
        # Pad only the 1-D columns (cheap; pad rows give sin(0)*sin(0)=0).
        u0 = jnp.pad(u0, (0, n_pad - n))
        u1 = jnp.pad(u1, (0, n_pad - n))
    u0 = u0.reshape(r_pad, LANE)
    u1 = u1.reshape(r_pad, LANE)

    out = pl.pallas_call(
        _sinsin_kernel,
        out_shape=jax.ShapeDtypeStruct((r_pad, LANE), out_dtype),
        grid_spec=pltpu.PrefetchScalarGridSpec(
            num_scalar_prefetch=0,
            grid=(nblocks,),
            in_specs=[
                pl.BlockSpec((tile_r, LANE), lambda i: (i, 0)),
                pl.BlockSpec((tile_r, LANE), lambda i: (i, 0)),
            ],
            out_specs=pl.BlockSpec((tile_r, LANE), lambda i: (i, 0)),
        ),
        compiler_params=pltpu.CompilerParams(
            dimension_semantics=("parallel",),  # shards blocks across v7x TCs
        ),
    )(u0, u1)

    # Back to the module's (N, 1) column layout, dropping pad rows.
    return out.reshape(n_pad, 1)[:n]


def my_feature(x, *, block_rows=2048, min_pallas_n=4096, force_pallas=False):
    """Dispatcher: plain-jnp for tiny N (fusible elementwise op), Pallas otherwise."""
    # TODO(synk): LabelTensor label bookkeeping ('sin(x)sin(y)') has no Pallas
    # equivalent; the kernel returns the plain (N, 1) value array.
    n = x.shape[0]
    if not force_pallas and n < min_pallas_n:
        return jnp.sin(x[:, 0:1] * jnp.pi) * jnp.sin(x[:, 1:2] * jnp.pi)
    return _my_feature_pallas(x, block_rows=block_rows)


if __name__ == "__main__":
    key = jax.random.PRNGKey(0)
    # Small point cloud consistent with the module: N points, 2 labels (u_0, u_1).
    # N deliberately not a multiple of 128 to exercise the padding path.
    N = 200
    x = jax.random.uniform(key, (N, 2), dtype=jnp.float32)

    # Force the Pallas path so the kernel itself runs even at this small N.
    y = my_feature(x, force_pallas=True)
    jax.block_until_ready(y)

    # Correctness check against plain-JAX reference of the PyTorch forward.
    ref = jnp.sin(x[:, 0:1] * jnp.pi) * jnp.sin(x[:, 1:2] * jnp.pi)
    assert y.shape == (N, 1)
    assert jnp.allclose(y, ref, atol=1e-6, rtol=1e-6)

    print("KERNEL_OK")
</pallas_src>

<mosaic_0001>
module attributes {stable_mosaic.version = 11 : i64} {
  func.func @_sinsin_kernel(%arg0: i32, %arg1: memref<8x128xf32, #tpu.memory_space<vmem>>, %arg2: memref<8x128xf32, #tpu.memory_space<vmem>>, %arg3: memref<8x128xf32, #tpu.memory_space<vmem>>) attributes {dimension_semantics = [#tpu.dimension_semantics<parallel>], iteration_bounds = array<i64: 1>, scalar_prefetch = 0 : i64, scratch_operands = 0 : i64, tpu.core_type = #tpu.core_type<tc>, window_params = [{transform_indices = @transform_0, window_bounds = array<i64: 8, 128>}, {transform_indices = @transform_1, window_bounds = array<i64: 8, 128>}, {transform_indices = @transform_2, window_bounds = array<i64: 8, 128>}]} {
    %c0 = arith.constant 0 : index
    %c0_0 = arith.constant 0 : index
    %0 = vector.load %arg1[%c0, %c0_0] : memref<8x128xf32, #tpu.memory_space<vmem>>, vector<8x128xf32>
    %cst = arith.constant 3.14159274 : f32
    %1 = vector.broadcast %cst : f32 to vector<8x128xf32>
    %2 = arith.mulf %0, %1 : vector<8x128xf32>
    %3 = math.sin %2 : vector<8x128xf32>
    %c0_1 = arith.constant 0 : index
    %c0_2 = arith.constant 0 : index
    %4 = vector.load %arg2[%c0_1, %c0_2] : memref<8x128xf32, #tpu.memory_space<vmem>>, vector<8x128xf32>
    %cst_3 = arith.constant 3.14159274 : f32
    %5 = vector.broadcast %cst_3 : f32 to vector<8x128xf32>
    %6 = arith.mulf %4, %5 : vector<8x128xf32>
    %7 = math.sin %6 : vector<8x128xf32>
    %8 = arith.mulf %3, %7 : vector<8x128xf32>
    %c0_4 = arith.constant 0 : index
    %c0_5 = arith.constant 0 : index
    %9 = vector.load %arg3[%c0_4, %c0_5] : memref<8x128xf32, #tpu.memory_space<vmem>>, vector<8x128xf32>
    tpu.vector_store %arg3[%c0_4, %c0_5], %8 {strides = array<i32>} : memref<8x128xf32, #tpu.memory_space<vmem>>, vector<8x128xf32>,
    return
  }
  func.func @transform_0(%arg0: i32) -> (i32, i32) {
    %c0_i32 = arith.constant 0 : i32
    %c0_i32_0 = arith.constant 0 : i32
    return %arg0, %c0_i32 : i32, i32
  }
  func.func @transform_1(%arg0: i32) -> (i32, i32) {
    %c0_i32 = arith.constant 0 : i32
    %c0_i32_0 = arith.constant 0 : i32
    return %arg0, %c0_i32 : i32, i32
  }
  func.func @transform_2(%arg0: i32) -> (i32, i32) {
    %c0_i32 = arith.constant 0 : i32
    %c0_i32_0 = arith.constant 0 : i32
    return %arg0, %c0_i32 : i32, i32
  }
}

</mosaic_0001>

<llo_original>
// kernel: _my_feature_pallas.1
$region0: #{_my_feature_pallas.1}
  #allocation0 [shape = 'u32[]', space=smem, size = 0x4, offset = 0x4, fixed_abs, tag = 'smem constant byte address 0x4 - core index']
  #allocation1 [shape = 'u32[144,128]{1,0:T(1,128)}', space=vmem, size = 0x12000, scoped, tag = 'internal scratch']
  %s0 = inlined_call_operand.vmem [shape: f32[8,128], index: 0, kind: input, shape index: {}]
  %s1 = inlined_call_operand.vmem [shape: f32[8,128], index: 1, kind: input, shape index: {}]
  %s2 = inlined_call_operand.vmem [shape: f32[8,128], index: 2, kind: output, shape index: {}]
  %s3 = sld [smem:[#allocation0]]
  $region18: #{_my_feature_pallas.1} parent=0
    _
  %s5 = ssub.s32 1, %s3
  %s6 = scalar_select 0, %s5, %s3
  // Predicated region
  $region2: #{_my_feature_pallas.1} parent=0 // pred_check
    _
  $region3: #{_my_feature_pallas.1} parent=0 // pred_check_branch
    %8 = sbr.rel (0) target = $region5
  $region4: #{_my_feature_pallas.1} parent=0 // pred_region
    _
  $region5: #{_my_feature_pallas.1} parent=0 // pred_fallthru
    _
  // Predicated region
  $region6: #{_my_feature_pallas.1} parent=0 // pred_check
    _
  $region7: #{_my_feature_pallas.1} parent=0 // pred_check_branch
    %10 = sbr.rel (0) target = $region9
  $region8: #{_my_feature_pallas.1} parent=0 // pred_region
    _
  $region9: #{_my_feature_pallas.1} parent=0 // pred_fallthru
    _
  %v11 = vld [vmem:[%s0] sm:$0xff]
  %v12 = vmul.f32 %v11, 3.1415927
  %v13 = vand.u32 2147483647, %v12
  %vm14 = vcmp.le.f32.partialorder %v13, 0.7853982
  %vm15 = vcmp.lt.s32.totalorder %v12, 0
  %v16 = vand.u32 %v12, 2139095040
  %v17 = vshrl.u32 %v16, 23
  %v18 = vsub.s32 %v17, 127
  %v19 = vand.u32 2147483647, %v12
  %v20 = vand.u32 %v19, 8388607
  %v21 = vor.u32 %v20, 8388608
  %v22 = vsub.s32 0, %v21
  %v23 = vadd.s32 %v18, 1
  %vm24 = vcmp.gt.s32.totalorder %v23, 0
  %v25 = vsel %vm24, %v23, 0
  %v26 = vshrl.u32 %v25, 5
  %v27 = vand.u32 %v25, 31
  %v28 = vsub.s32 32, %v27
  %v29 = vshrl.u32 683565275, %v28
  %v30 = vshll.u32 683565275, %v27
  %v31 = vshrl.u32 2475754826, %v28
  %v32 = vor.u32 %v30, %v31
  %v33 = vshll.u32 2475754826, %v27
  %v34 = vshrl.u32 2131351028, %v28
  %v35 = vor.u32 %v33, %v34
  %v36 = vshll.u32 2131351028, %v27
  %v37 = vshrl.u32 2102212464, %v28
  %v38 = vor.u32 %v36, %v37
  %v39 = vshll.u32 2102212464, %v27
  %v40 = vshrl.u32 920167782, %v28
  %v41 = vor.u32 %v39, %v40
  %v42 = vshll.u32 920167782, %v27
  %v43 = vshrl.u32 1326507024, %v28
  %v44 = vor.u32 %v42, %v43
  %vm45 = vcmp.lt.s32.totalorder %v26, 1
  %vm46 = vcmp.lt.s32.totalorder %v26, 2
  %vm47 = vcmp.lt.s32.totalorder %v26, 3
  %vm48 = vcmp.lt.s32.totalorder %v26, 4
  %v49 = vsel %vm45, %v29, %v32
  %v50 = vsel %vm48, %v38, 2102212464
  %v51 = vsel %vm47, %v35, %v50
  %v52 = vsel %vm46, %v49, %v51
  %v53 = vsel %vm45, %v32, %v35
  %v54 = vsel %vm48, %v41, 920167782
  %v55 = vsel %vm47, %v38, %v54
  %v56 = vsel %vm46, %v53, %v55
  %v57 = vsel %vm45, %v35, %v38
  %v58 = vsel %vm48, %v44, 1326507024
  %v59 = vsel %vm47, %v41, %v58
  %v60 = vsel %vm46, %v57, %v59
  %v61 = vshll.u32 %v21, 8
  %v62 = vmul.u32.u64.compose %v61, %v60
  %v63 = vextract.low.u32 %v62
  %v64 = vextract.high.u32 %v62
  %v65 = vmul.u32.u64.compose %v61, %v56
  %v66 = vextract.low.u32 %v65
  %v67 = vextract.high.u32 %v65
  %v68 = vmul.u32 %v61, %v52
  %v69 = vadd.s32 %v64, %v66
  %vm70 = vc.u32 %v64, %v66
  %v71 = vadd.s32 %v67, 1
  %v72 = vsel %vm70, %v71, %v67
  %v73 = vadd.s32 %v68, %v72
  %v74 = vadd.s32 %v73, 536870912
  %v75 = vshrl.u32 %v74, 30
  %v76 = vshll.u32 %v75, 30
  %v77 = vsub.s32 %v73, %v76
  %vm78 = vcmp.lt.s32.totalorder %v77, 0
  %v79 = vsub.s32 0, %v77
  %v80 = vsel %vm78, %v79, %v77
  %v81 = vclz %v80
  %v82 = vsub.s32 %v81, 2
  %vm83 = vcmp.gt.s32.totalorder 0, %v82
  %v84 = vsel %vm83, 0, %v82
  %v85 = vsub.s32 32, %v84
  %v86 = vshll.u32 %v77, %v84
  %v87 = vshrl.u32 %v69, %v85
  %v88 = vor.u32 %v86, %v87
  %v89 = vsub.s32 4294967266, %v84
  %v90 = vadd.s32 %v89, 127
  %v91 = vshll.u32 %v90, 23
  %v92 = vor.u32 4788187, %v91
  %v93 = vand.u32 2147483647, %v92
  %v95 = vcvt.s32.f32 %v88
  %v96 = vmul.f32 %v95, %v93
  %v97 = vxor.u32 %v96, 2147483648
  %v98 = vsel %vm15, %v97, %v96
  %v99 = vsub.s32 4, %v75
  %v100 = vsel %vm15, %v99, %v75
  %v101 = vsel %vm14, %v12, %v98
  %v102 = vsel %vm14, 0, %v100
  %v103 = vcosq.f32.pop %v101
  %v104 = vsinq.f32.pop %v101
  %vm105 = vweird.f32 %v12
  %v106 = vadd.s32 %v102, 3
  %v107 = vand.u32 %v106, 3
  %vm108 = vcmp.lt.s32.totalorder %v107, 2
  %vm109 = vcmp.eq.s32.totalorder %v107, 0
  %v110 = vxor.u32 %v104, 2147483648
  %v111 = vsel %vm109, %v103, %v110
  %vm112 = vcmp.eq.s32.totalorder %v107, 2
  %v113 = vxor.u32 %v103, 2147483648
  %v114 = vsel %vm112, %v113, %v104
  %v115 = vsel %vm108, %v111, %v114
  %v116 = vsel %vm105, nan, %v115
  %v117 = vld [vmem:[%s1] sm:$0xff]
  %v118 = vmul.f32 %v117, 3.1415927
  %v119 = vand.u32 2147483647, %v118
  %vm120 = vcmp.le.f32.partialorder %v119, 0.7853982
  %vm121 = vcmp.lt.s32.totalorder %v118, 0
  %v122 = vand.u32 %v118, 2139095040
  %v123 = vshrl.u32 %v122, 23
  %v124 = vsub.s32 %v123, 127
  %v125 = vand.u32 2147483647, %v118
  %v126 = vand.u32 %v125, 8388607
  %v127 = vor.u32 %v126, 8388608
  %v128 = vsub.s32 0, %v127
  %v129 = vadd.s32 %v124, 1
  %vm130 = vcmp.gt.s32.totalorder %v129, 0
  %v131 = vsel %vm130, %v129, 0
  %v132 = vshrl.u32 %v131, 5
  %v133 = vand.u32 %v131, 31
  %v134 = vsub.s32 32, %v133
  %v135 = vshrl.u32 683565275, %v134
  %v136 = vshll.u32 683565275, %v133
  %v137 = vshrl.u32 2475754826, %v134
  %v138 = vor.u32 %v136, %v137
  %v139 = vshll.u32 2475754826, %v133
  %v140 = vshrl.u32 2131351028, %v134
  %v141 = vor.u32 %v139, %v140
  %v142 = vshll.u32 2131351028, %v133
  %v143 = vshrl.u32 2102212464, %v134
  %v144 = vor.u32 %v142, %v143
  %v145 = vshll.u32 2102212464, %v133
  %v146 = vshrl.u32 920167782, %v134
  %v147 = vor.u32 %v145, %v146
  %v148 = vshll.u32 920167782, %v133
  %v149 = vshrl.u32 1326507024, %v134
  %v150 = vor.u32 %v148, %v149
  %vm151 = vcmp.lt.s32.totalorder %v132, 1
  %vm152 = vcmp.lt.s32.totalorder %v132, 2
  %vm153 = vcmp.lt.s32.totalorder %v132, 3
  %vm154 = vcmp.lt.s32.totalorder %v132, 4
  %v155 = vsel %vm151, %v135, %v138
  %v156 = vsel %vm154, %v144, 2102212464
  %v157 = vsel %vm153, %v141, %v156
  %v158 = vsel %vm152, %v155, %v157
  %v159 = vsel %vm151, %v138, %v141
  %v160 = vsel %vm154, %v147, 920167782
  %v161 = vsel %vm153, %v144, %v160
  %v162 = vsel %vm152, %v159, %v161
  %v163 = vsel %vm151, %v141, %v144
  %v164 = vsel %vm154, %v150, 1326507024
  %v165 = vsel %vm153, %v147, %v164
  %v166 = vsel %vm152, %v163, %v165
  %v167 = vshll.u32 %v127, 8
  %v168 = vmul.u32.u64.compose %v167, %v166
  %v169 = vextract.low.u32 %v168
  %v170 = vextract.high.u32 %v168
  %v171 = vmul.u32.u64.compose %v167, %v162
  %v172 = vextract.low.u32 %v171
  %v173 = vextract.high.u32 %v171
  %v174 = vmul.u32 %v167, %v158
  %v175 = vadd.s32 %v170, %v172
  %vm176 = vc.u32 %v170, %v172
  %v177 = vadd.s32 %v173, 1
  %v178 = vsel %vm176, %v177, %v173
  %v179 = vadd.s32 %v174, %v178
  %v180 = vadd.s32 %v179, 536870912
  %v181 = vshrl.u32 %v180, 30
  %v182 = vshll.u32 %v181, 30
  %v183 = vsub.s32 %v179, %v182
  %vm184 = vcmp.lt.s32.totalorder %v183, 0
  %v185 = vsub.s32 0, %v183
  %v186 = vsel %vm184, %v185, %v183
  %v187 = vclz %v186
  %v188 = vsub.s32 %v187, 2
  %vm189 = vcmp.gt.s32.totalorder 0, %v188
  %v190 = vsel %vm189, 0, %v188
  %v191 = vsub.s32 32, %v190
  %v192 = vshll.u32 %v183, %v190
  %v193 = vshrl.u32 %v175, %v191
  %v194 = vor.u32 %v192, %v193
  %v195 = vsub.s32 4294967266, %v190
  %v196 = vadd.s32 %v195, 127
  %v197 = vshll.u32 %v196, 23
  %v198 = vor.u32 4788187, %v197
  %v199 = vand.u32 2147483647, %v198
  %v201 = vcvt.s32.f32 %v194
  %v202 = vmul.f32 %v201, %v199
  %v203 = vxor.u32 %v202, 2147483648
  %v204 = vsel %vm121, %v203, %v202
  %v205 = vsub.s32 4, %v181
  %v206 = vsel %vm121, %v205, %v181
  %v207 = vsel %vm120, %v118, %v204
  %v208 = vsel %vm120, 0, %v206
  %v209 = vcosq.f32.pop %v207
  %v210 = vsinq.f32.pop %v207
  %vm211 = vweird.f32 %v118
  %v212 = vadd.s32 %v208, 3
  %v213 = vand.u32 %v212, 3
  %vm214 = vcmp.lt.s32.totalorder %v213, 2
  %vm215 = vcmp.eq.s32.totalorder %v213, 0
  %v216 = vxor.u32 %v210, 2147483648
  %v217 = vsel %vm215, %v209, %v216
  %vm218 = vcmp.eq.s32.totalorder %v213, 2
  %v219 = vxor.u32 %v209, 2147483648
  %v220 = vsel %vm218, %v219, %v210
  %v221 = vsel %vm214, %v217, %v220
  %v222 = vsel %vm211, nan, %v221
  %v223 = vmul.f32 %v116, %v222
  %224 = vst [vmem:[%s2] sm:$0xff] %v223
  // Predicated region
  $region10: #{_my_feature_pallas.1} parent=0 // pred_check
    _
  $region11: #{_my_feature_pallas.1} parent=0 // pred_check_branch
    %226 = sbr.rel (0) target = $region13
  $region12: #{_my_feature_pallas.1} parent=0 // pred_region
    _
  $region13: #{_my_feature_pallas.1} parent=0 // pred_fallthru
    _
  // Predicated region
  $region14: #{_my_feature_pallas.1} parent=0 // pred_check
    _
  $region15: #{_my_feature_pallas.1} parent=0 // pred_check_branch
    %228 = sbr.rel (0) target = $region17
  $region16: #{_my_feature_pallas.1} parent=0 // pred_region
    _
  $region17: #{_my_feature_pallas.1} parent=0 // pred_fallthru
    _

</llo_original>
